<compile_context>
chip_gen: v5e
topology: v5e:2x2
jax: 0.10.0
libtpu: 0.0.40
codegen_flags: <defaults>
</compile_context>

<pallas_src>
import functools

import jax
import jax.numpy as jnp
from jax.experimental import pallas as pl
from jax.experimental.pallas import tpu as pltpu


def _round_up(v, m):
    return (v + m - 1) // m * m


def _i32(v):
    """Two's-complement int32 value of a 32-bit constant, as a Python int."""
    v &= 0xFFFFFFFF
    return v - (1 << 32) if v >= (1 << 31) else v


# murmur3-style mixing constants (expressed as signed int32)
_ROW_MUL = _i32(0x9E3779B1)
_COL_MUL = _i32(0x85EBCA6B)
_SEED_MUL = _i32(0xC2B2AE35)
_MIX1 = _i32(0x7FEB352D)
_MIX2 = _i32(0x846CA68B)


def _linear_dropout_kernel(seed_ref, x_ref, w_ref, b_ref, o_ref, *,
                           p_drop, training, tile_m):
    x = x_ref[...]
    scale = 1.0

    if training and p_drop > 0.0:
        m, k = x.shape
        # Global element coordinates -> same mask regardless of batch tiling,
        # and different mask per grid block.
        row = (jax.lax.broadcasted_iota(jnp.int32, (m, k), 0)
               + pl.program_id(0) * tile_m)
        col = jax.lax.broadcasted_iota(jnp.int32, (m, k), 1)
        seed = seed_ref[0]

        # Counter-based integer hash (all int32 ops: portable to Mosaic and to
        # the CPU interpreter; no pltpu.prng_* needed).
        h = row * _ROW_MUL + col * _COL_MUL + seed * _SEED_MUL
        h = h ^ ((h >> 16) & 0xFFFF)    # logical >>16 via arithmetic-shift + mask
        h = h * _MIX1
        h = h ^ ((h >> 15) & 0x1FFFF)   # logical >>15
        h = h * _MIX2
        h = h ^ ((h >> 16) & 0xFFFF)

        # Integer threshold compare: h is uniform over int32, keep w.p. (1 - p).
        thr = int(round(p_drop * (1 << 32))) - (1 << 31)
        thr = max(-(1 << 31), min(thr, (1 << 31) - 1))
        keep = h >= jnp.int32(thr)
        x = jnp.where(keep, x, 0.0)
        scale = 1.0 / (1.0 - p_drop)

    # x @ W^T on the MXU without materializing a transpose:
    # contract x's dim 1 with weight's dim 1 (weight kept in (out, in) layout).
    acc = jax.lax.dot_general(
        x, w_ref[...],
        dimension_numbers=(((1,), (1,)), ((), ())),
        preferred_element_type=jnp.float32,
    )
    if scale != 1.0:
        # Hoisted dropout scale: applied once to the smaller (tile_m, out) acc,
        # before the (unscaled) bias add.
        acc = acc * jnp.float32(scale)
    o_ref[...] = (acc + b_ref[...]).astype(o_ref.dtype)


def linear_regression_forward(x, weight, bias, *, p_drop=0.5, training=False,
                              seed=0, max_rows_per_block=512):
    """Forward of LinearRegressionModel: dropout(p) -> x @ W.T + b.

    x:      (batch, input_dim) f32
    weight: (output_dim, input_dim) f32   (PyTorch nn.Linear layout, NOT transposed)
    bias:   (output_dim,) f32
    """
    batch, in_dim = x.shape
    out_dim, w_in = weight.shape
    assert w_in == in_dim and bias.shape == (out_dim,)

    # NOTE: at toy sizes (8x32 @ 32x16) a fused XLA dot beats any pallas_call
    # (~0.35us fixed per-step overhead); the Pallas path is kept because it is
    # the point of this exercise and it scales to large batches via the grid below.

    # Lane-dense output: pad out_dim up to a multiple of 128 so stores are full
    # vregs (no masked vst.msk); padded weight rows / bias entries are zero and
    # the padded columns are sliced off after the call.
    out_pad = _round_up(out_dim, 128)
    if out_pad != out_dim:
        weight = jnp.pad(weight, ((0, out_pad - out_dim), (0, 0)))
        bias = jnp.pad(bias, (0, out_pad - out_dim))
    bias2d = bias.reshape(1, out_pad)

    # Batch tiling: one block for small batches; big row tiles + "parallel" grid
    # axis for large batches (uses both TensorCores on v7x / megacore sharding).
    tile_m = min(_round_up(batch, 8), max_rows_per_block)
    batch_pad = _round_up(batch, tile_m)
    if batch_pad != batch:
        x = jnp.pad(x, ((0, batch_pad - batch), (0, 0)))
    grid_m = batch_pad // tile_m

    kernel = functools.partial(
        _linear_dropout_kernel,
        p_drop=float(p_drop), training=bool(training), tile_m=tile_m,
    )
    # Seed travels through SMEM (scalar prefetch): a new seed every training step
    # does NOT trigger a Mosaic recompile.
    seed_arr = jnp.asarray([seed], dtype=jnp.int32)

    out = pl.pallas_call(
        kernel,
        out_shape=jax.ShapeDtypeStruct((batch_pad, out_pad), x.dtype),
        grid_spec=pltpu.PrefetchScalarGridSpec(
            num_scalar_prefetch=1,
            grid=(grid_m,),
            in_specs=[
                pl.BlockSpec((tile_m, in_dim), lambda i, seed_ref: (i, 0)),
                pl.BlockSpec((out_pad, in_dim), lambda i, seed_ref: (0, 0)),
                pl.BlockSpec((1, out_pad), lambda i, seed_ref: (0, 0)),
            ],
            out_specs=pl.BlockSpec((tile_m, out_pad), lambda i, seed_ref: (i, 0)),
        ),
        compiler_params=pltpu.CompilerParams(
            dimension_semantics=("parallel",),
        ),
    )(seed_arr, x, weight, bias2d)

    return out[:batch, :out_dim]


if __name__ == "__main__":
    batch, input_dim, output_dim = 8, 32, 16

    key = jax.random.PRNGKey(0)
    k_x, k_w, k_b = jax.random.split(key, 3)

    x = jax.random.normal(k_x, (batch, input_dim), dtype=jnp.float32)

    # Deterministic nn.Linear-style init: U(-1/sqrt(in), 1/sqrt(in))
    bound = 1.0 / (input_dim ** 0.5)
    weight = jax.random.uniform(
        k_w, (output_dim, input_dim), minval=-bound, maxval=bound, dtype=jnp.float32
    )
    bias = jax.random.uniform(
        k_b, (output_dim,), minval=-bound, maxval=bound, dtype=jnp.float32
    )

    # --- eval mode (dropout = identity): compare against pure-JAX reference ---
    out_eval = jax.block_until_ready(
        linear_regression_forward(x, weight, bias, training=False))
    ref = x @ weight.T + bias
    assert out_eval.shape == (batch, output_dim)
    assert jnp.allclose(out_eval, ref, atol=1e-5, rtol=1e-5), "mismatch vs reference"

    # --- eval mode with ragged batch (exercises pad + slice path) ---
    x10 = jax.random.normal(k_x, (10, input_dim), dtype=jnp.float32)
    out10 = jax.block_until_ready(
        linear_regression_forward(x10, weight, bias, training=False))
    assert out10.shape == (10, output_dim)
    assert jnp.allclose(out10, x10 @ weight.T + bias, atol=1e-5, rtol=1e-5)

    # --- training mode: in-kernel dropout, p=0.5 ---
    out_a = jax.block_until_ready(linear_regression_forward(
        x, weight, bias, p_drop=0.5, training=True, seed=1234))
    out_b = jax.block_until_ready(linear_regression_forward(
        x, weight, bias, p_drop=0.5, training=True, seed=1234))
    out_c = jax.block_until_ready(linear_regression_forward(
        x, weight, bias, p_drop=0.5, training=True, seed=4321))
    assert out_a.shape == (batch, output_dim)
    assert bool(jnp.all(jnp.isfinite(out_a)))
    assert bool(jnp.array_equal(out_a, out_b)), "same seed must give same mask"
    assert not bool(jnp.array_equal(out_a, out_c)), "different seed must change mask"

    print("KERNEL_OK")
</pallas_src>

<mosaic_0001>
module attributes {stable_mosaic.version = 11 : i64} {
  func.func @_linear_dropout_kernel(%arg0: i32, %arg1: memref<1xi32, #tpu.memory_space<smem>>, %arg2: memref<8x32xf32, #tpu.memory_space<vmem>>, %arg3: memref<128x32xf32, #tpu.memory_space<vmem>>, %arg4: memref<1x128xf32, #tpu.memory_space<vmem>>, %arg5: memref<8x128xf32, #tpu.memory_space<vmem>>) attributes {dimension_semantics = [#tpu.dimension_semantics<parallel>], iteration_bounds = array<i64: 1>, scalar_prefetch = 1 : i64, scratch_operands = 0 : i64, tpu.core_type = #tpu.core_type<tc>, window_params = [{transform_indices = @transform_0, window_bounds = array<i64: 8, 32>}, {pipeline_mode = #tpu.pipeline_mode<synchronous>, transform_indices = @transform_1, window_bounds = array<i64: 128, 32>}, {pipeline_mode = #tpu.pipeline_mode<synchronous>, transform_indices = @transform_2, window_bounds = array<i64: 1, 128>}, {transform_indices = @transform_3, window_bounds = array<i64: 8, 128>}]} {
    %c0 = arith.constant 0 : index
    %c0_0 = arith.constant 0 : index
    %0 = vector.load %arg2[%c0, %c0_0] : memref<8x32xf32, #tpu.memory_space<vmem>>, vector<8x32xf32>
    %c0_1 = arith.constant 0 : index
    %c0_2 = arith.constant 0 : index
    %1 = vector.load %arg3[%c0_1, %c0_2] : memref<128x32xf32, #tpu.memory_space<vmem>>, vector<128x32xf32>
    %cst = arith.constant dense<0.000000e+00> : vector<8x128xf32>
    %2 = tpu.matmul %0, %1, %cst {dimension_numbers = #tpu.dot_dimension_numbers<[1], [1], [0], [0], [0, 0, 1, 0], [], []>} : vector<8x32xf32>, vector<128x32xf32>, vector<8x128xf32> -> vector<8x128xf32>
    %c0_3 = arith.constant 0 : index
    %c0_4 = arith.constant 0 : index
    %3 = vector.load %arg4[%c0_3, %c0_4] : memref<1x128xf32, #tpu.memory_space<vmem>>, vector<1x128xf32>
    %4 = vector.broadcast %3 : vector<1x128xf32> to vector<8x128xf32>
    %5 = arith.addf %2, %4 : vector<8x128xf32>
    %c0_5 = arith.constant 0 : index
    %c0_6 = arith.constant 0 : index
    %6 = vector.load %arg5[%c0_5, %c0_6] : memref<8x128xf32, #tpu.memory_space<vmem>>, vector<8x128xf32>
    tpu.vector_store %arg5[%c0_5, %c0_6], %5 {strides = array<i32>} : memref<8x128xf32, #tpu.memory_space<vmem>>, vector<8x128xf32>,
    return
  }
  func.func @transform_0(%arg0: i32, %arg1: memref<1xi32, #tpu.memory_space<smem>>) -> (i32, i32) {
    %c0_i32 = arith.constant 0 : i32
    %c0_i32_0 = arith.constant 0 : i32
    return %arg0, %c0_i32 : i32, i32
  }
  func.func @transform_1(%arg0: i32, %arg1: memref<1xi32, #tpu.memory_space<smem>>) -> (i32, i32) {
    %c0_i32 = arith.constant 0 : i32
    %c0_i32_0 = arith.constant 0 : i32
    %c0_i32_1 = arith.constant 0 : i32
    return %c0_i32, %c0_i32_0 : i32, i32
  }
  func.func @transform_2(%arg0: i32, %arg1: memref<1xi32, #tpu.memory_space<smem>>) -> (i32, i32) {
    %c0_i32 = arith.constant 0 : i32
    %c0_i32_0 = arith.constant 0 : i32
    %c0_i32_1 = arith.constant 0 : i32
    return %c0_i32, %c0_i32_0 : i32, i32
  }
  func.func @transform_3(%arg0: i32, %arg1: memref<1xi32, #tpu.memory_space<smem>>) -> (i32, i32) {
    %c0_i32 = arith.constant 0 : i32
    %c0_i32_0 = arith.constant 0 : i32
    return %arg0, %c0_i32 : i32, i32
  }
}

</mosaic_0001>

<llo_original>
// kernel: tpu_custom_call.1
$region0: #{tpu_custom_call.1}
  #allocation0 [shape = 'u32[]', space=smem, size = 0x4, offset = 0x4, fixed_abs, tag = 'smem constant byte address 0x4 - core index']
  #allocation1 [shape = 'u32[72,128]{1,0:T(1,128)}', space=vmem, size = 0x9000, scoped, tag = 'internal scratch']
  #allocation2 [shape = 's32[1]{0}', space=sflag, size = 0x4, scoped, tag = 'scoped memory for tpu_custom_call.1']
  #allocation3 [shape = 's32[1]{0:T(128)S(6)}', space=smem, size = 0x200, scoped, tag = 'prefetched SMEM operand 0']
  %s0 = inlined_call_operand.<no memory space> [shape: s32[1], index: 0, kind: input, shape index: {}]
  %s1 = inlined_call_operand.vmem [shape: f32[8,32], index: 1, kind: input, shape index: {}]
  %s2 = inlined_call_operand.vmem [shape: f32[128,32], index: 2, kind: input, shape index: {}]
  %s3 = inlined_call_operand.vmem [shape: f32[1,128], index: 3, kind: input, shape index: {}]
  %s4 = inlined_call_operand.hbm [shape: f32[8,128], index: 4, kind: output, shape index: {}]
  %s5 = sld [smem:[#allocation0]]
  $region22: #{tpu_custom_call.1} parent=0
    _
  %s7 = ssub.s32 1, %s5
  %s8 = scalar_select 0, %s7, %s5
  %9 = sst [smem:[#allocation3]] %s0
  $region1: #{tpu_custom_call.1} parent=0
    #allocation4 [shape = 'u8[4096]{0}', space=vmem, size = 0x1000, scoped, tag = 'output window, operand 0, single buffered']
    #allocation5 [shape = 's32[1]{0}', space=sflag, size = 0x4, scoped, tag = 'scoped memory for tpu_custom_call.1']
    %10 = vsyncpa [#allocation5], 0
    // Predicated region
    $region2: #{tpu_custom_call.1} parent=1 // pred_check
      _
    $region3: #{tpu_custom_call.1} parent=1 // pred_check_branch
      %12 = sbr.rel (0) target = $region5
    $region4: #{tpu_custom_call.1} parent=1 // pred_region
      _
    $region5: #{tpu_custom_call.1} parent=1 // pred_fallthru
      _
    // Predicated region
    $region6: #{tpu_custom_call.1} parent=1 // pred_check
      _
    $region7: #{tpu_custom_call.1} parent=1 // pred_check_branch
      %14 = sbr.rel (0) target = $region9
    $region8: #{tpu_custom_call.1} parent=1 // pred_region
      _
    $region9: #{tpu_custom_call.1} parent=1 // pred_fallthru
      _
    // Predicated region
    $region10: #{tpu_custom_call.1} parent=1 // pred_check
      _
    $region11: #{tpu_custom_call.1} parent=1 // pred_check_branch
      %16 = sbr.rel (0) target = $region13
    $region12: #{tpu_custom_call.1} parent=1 // pred_region
      _
    $region13: #{tpu_custom_call.1} parent=1 // pred_fallthru
      _
    %v17 = vld [vmem:[%s1] sm:$0xff]
    %v18 = vld [vmem:[%s2] sm:$0xff]
    %v19 = vld [vmem:[%s2 + $0x8] sm:$0xff]
    %v20 = vld [vmem:[%s2 + $0x10] sm:$0xff]
    %v21 = vld [vmem:[%s2 + $0x18] sm:$0xff]
    %v22 = vld [vmem:[%s2 + $0x20] sm:$0xff]
    %v23 = vld [vmem:[%s2 + $0x28] sm:$0xff]
    %v24 = vld [vmem:[%s2 + $0x30] sm:$0xff]
    %v25 = vld [vmem:[%s2 + $0x38] sm:$0xff]
    %v26 = vld [vmem:[%s2 + $0x40] sm:$0xff]
    %v27 = vld [vmem:[%s2 + $0x48] sm:$0xff]
    %v28 = vld [vmem:[%s2 + $0x50] sm:$0xff]
    %v29 = vld [vmem:[%s2 + $0x58] sm:$0xff]
    %v30 = vld [vmem:[%s2 + $0x60] sm:$0xff]
    %v31 = vld [vmem:[%s2 + $0x68] sm:$0xff]
    %v32 = vld [vmem:[%s2 + $0x70] sm:$0xff]
    %v33 = vld [vmem:[%s2 + $0x78] sm:$0xff]
    %v34 = vld [vmem:[%s3] sm:$0x1]
    %v36 = vperm.slane %v34, 0
    %vm38 = vcmask 261120
    %v40 = vsel %vm38, %v17, 0
    %v43 = vsel %vm38, %v18, 0
    %v46 = vsel %vm38, %v19, 0
    %v49 = vsel %vm38, %v20, 0
    %v52 = vsel %vm38, %v21, 0
    %v55 = vsel %vm38, %v22, 0
    %v58 = vsel %vm38, %v23, 0
    %v61 = vsel %vm38, %v24, 0
    %v64 = vsel %vm38, %v25, 0
    %v67 = vsel %vm38, %v26, 0
    %v70 = vsel %vm38, %v27, 0
    %v73 = vsel %vm38, %v28, 0
    %v76 = vsel %vm38, %v29, 0
    %v79 = vsel %vm38, %v30, 0
    %v82 = vsel %vm38, %v31, 0
    %v85 = vsel %vm38, %v32, 0
    %v88 = vsel %vm38, %v33, 0
    %90 = vmatpush.xpose.msra.mxu0 %v88
    %91 = vmatpush.xpose.msra.mxu0 %v85
    %92 = vmatpush.xpose.msra.mxu0 %v82
    %93 = vmatpush.xpose.msra.mxu0 %v79
    %94 = vmatpush.xpose.msra.mxu0 %v76
    %95 = vmatpush.xpose.msra.mxu0 %v73
    %96 = vmatpush.xpose.msra.mxu0 %v70
    %97 = vmatpush.xpose.msra.mxu0 %v67
    %98 = vmatpush.xpose.msra.mxu0 %v64
    %99 = vmatpush.xpose.msra.mxu0 %v61
    %100 = vmatpush.xpose.msra.mxu0 %v58
    %101 = vmatpush.xpose.msra.mxu0 %v55
    %102 = vmatpush.xpose.msra.mxu0 %v52
    %103 = vmatpush.xpose.msra.mxu0 %v49
    %104 = vmatpush.xpose.msra.mxu0 %v46
    %105 = vmatpush.xpose.msra.mxu0 %v43
    %106 = vmatmul.f32.gmra.mxu0 %v40
    %v107 = vpop.f32.mrf.mxu0
    %v108 = vadd.f32 %v36, %v107
    %109 = vdwg.mxu0
    %110 = vst [vmem:[#allocation4] sm:$0xff] %v108
    // Predicated region
    $region14: #{tpu_custom_call.1} parent=1 // pred_check
      _
    $region15: #{tpu_custom_call.1} parent=1 // pred_check_branch
      %112 = sbr.rel (0) target = $region17
    $region16: #{tpu_custom_call.1} parent=1 // pred_region
      %114 = vsyncadd [#allocation5], 0
      %s116 = sshll.u32 [#allocation4], 4
      %s117 = int_to_ptr.vmem [resolvable:$true] %s116
      %s118 = sshll.u32 %s4, 4
      %s119 = int_to_ptr.hbm [resolvable:$true] %s118
      %121 = dma.vmem_to_hbm [thread:$0]  %s117, 128, %s119, [#allocation5]
    $region17: #{tpu_custom_call.1} parent=1 // pred_fallthru
      _
    // Predicated region
    $region18: #{tpu_custom_call.1} parent=1 // pred_check
      _
    $region19: #{tpu_custom_call.1} parent=1 // pred_check_branch
      %123 = sbr.rel (0) target = $region21
    $region20: #{tpu_custom_call.1} parent=1 // pred_region
      %125 = dma.done [#allocation5], 128
    $region21: #{tpu_custom_call.1} parent=1 // pred_fallthru
      _
    %126 = vsyncpa [#allocation5], 1

</llo_original>
